<compile_context>
chip_gen: v6e
topology: v6e:2x2x1
jax: 0.10.0
libtpu: 0.0.40
codegen_flags: <defaults>
</compile_context>

<pallas_src>
import math

import jax
import jax.numpy as jnp
from jax.experimental import pallas as pl
from jax.experimental.pallas import tpu as pltpu


def _round_up(x, m):
    return (x + m - 1) // m * m


def critic_kernel(
    s_ref, a_ref, p_ref,
    wbev_ref, bbev_ref,
    w1s_ref, w1a_ref, b1_ref,
    w2q_ref, w2p_ref, b2_ref,
    w3_ref, b3_ref,
    q_ref,
):
    f32 = jnp.float32
    bf16 = jnp.bfloat16

    # BEV_fc(p): no activation; f32 accumulation, re-pack to bf16 for reuse.
    pf = (jnp.dot(p_ref[...], wbev_ref[...], preferred_element_type=f32)
          + bbev_ref[...])
    pf = pf.astype(bf16)                                    # (bb, H)

    # Fused layer 1 (l1 & l4): relu(s @ W1s + a @ W1a + [b1|b4]) -> (bb, 2H)
    h = (jnp.dot(s_ref[...], w1s_ref[...], preferred_element_type=f32)
         + jnp.dot(a_ref[...], w1a_ref[...], preferred_element_type=f32)
         + b1_ref[...])
    h = jnp.maximum(h, 0.0).astype(bf16)

    # Fused layer 2 (l2 & l5): block-diag on the q halves + shared BEV half.
    g = (jnp.dot(h, w2q_ref[...], preferred_element_type=f32)
         + jnp.dot(pf, w2p_ref[...], preferred_element_type=f32)
         + b2_ref[...])
    g = jnp.maximum(g, 0.0).astype(bf16)

    # Fused output layer (l3 & l6): single lane-packed (bb, 2) store.
    q_ref[...] = (jnp.dot(g, w3_ref[...], preferred_element_type=f32)
                  + b3_ref[...])


def _prep_weights(params, state_dim, hidden):
    """Fuse / pad / cast the weights once (plain-JAX glue, runs under jit)."""
    bf16, f32 = jnp.bfloat16, jnp.float32
    H = hidden

    # BEV weights: pad K (1000) up to a multiple of 128.
    wbev = params["wbev"]
    K = wbev.shape[0]
    Kp = _round_up(K, 128)
    wbev_p = jnp.pad(wbev, ((0, Kp - K), (0, 0))).astype(bf16)      # (Kp, H)
    bbev = params["bbev"].astype(f32)

    # Layer 1: stack heads along N, split state/action halves along K.
    w1 = jnp.concatenate([params["w1"], params["w4"]], axis=1)      # (sa, 2H)
    w1s = w1[:state_dim].astype(bf16)
    w1a = w1[state_dim:].astype(bf16)
    b1 = jnp.concatenate([params["b1"], params["b4"]], axis=1).astype(f32)

    # Layer 2: block-diagonal on the q halves, stacked BEV halves.
    w2a, w2b = params["w2"][:H], params["w2"][H:]
    w5a, w5b = params["w5"][:H], params["w5"][H:]
    w2q = jnp.zeros((2 * H, 2 * H), f32)
    w2q = w2q.at[:H, :H].set(w2a).at[H:, H:].set(w5a)
    w2q = w2q.astype(bf16)                                          # (2H, 2H)
    w2p = jnp.concatenate([w2b, w5b], axis=1).astype(bf16)          # (H, 2H)
    b2 = jnp.concatenate([params["b2"], params["b5"]], axis=1).astype(f32)

    # Output layer: block-diagonal -> lane-packed (2H, 2).
    w3 = jnp.zeros((2 * H, 2), f32)
    w3 = w3.at[:H, 0:1].set(params["w3"]).at[H:, 1:2].set(params["w6"])
    w3 = w3.astype(bf16)
    b3 = jnp.concatenate([params["b3"], params["b6"]], axis=1).astype(f32)

    return (wbev_p, bbev, w1s, w1a, b1, w2q, w2p, b2, w3, b3), Kp


def critic_forward(s, p, a, params, *, block_b=128):
    """s: (B, state_dim), p: (B, 1000), a: (B, action_dim) -> (q1, q2)."""
    B, state_dim = s.shape
    action_dim = a.shape[1]
    H = params["w1"].shape[1]
    bf16 = jnp.bfloat16

    (wbev_p, bbev, w1s, w1a, b1, w2q, w2p, b2, w3, b3), Kp = _prep_weights(
        params, state_dim, H)

    # Batch tiling: pad B to a multiple of the batch block (>= 8 sublanes).
    bb = min(block_b, _round_up(B, 8))
    B_pad = _round_up(B, bb)

    def pad_b(x):
        return jnp.pad(x, ((0, B_pad - B), (0, 0)))

    s_p = pad_b(s.astype(bf16))
    a_p = pad_b(a.astype(bf16))
    p_p = pad_b(jnp.pad(p, ((0, 0), (0, Kp - p.shape[1]))).astype(bf16))

    def batch_spec(cols):
        return pl.BlockSpec((bb, cols), lambda i: (i, 0))

    def resident(arr):  # weights / biases stay resident across the batch grid
        return pl.BlockSpec(arr.shape, lambda i: (0, 0))

    in_specs = [
        batch_spec(state_dim), batch_spec(action_dim), batch_spec(Kp),
        resident(wbev_p), resident(bbev),
        resident(w1s), resident(w1a), resident(b1),
        resident(w2q), resident(w2p), resident(b2),
        resident(w3), resident(b3),
    ]

    q = pl.pallas_call(
        critic_kernel,
        out_shape=jax.ShapeDtypeStruct((B_pad, 2), jnp.float32),
        grid=(B_pad // bb,),
        in_specs=in_specs,
        out_specs=pl.BlockSpec((bb, 2), lambda i: (i, 0)),
        compiler_params=pltpu.CompilerParams(
            dimension_semantics=("parallel",)),
    )(s_p, a_p, p_p, wbev_p, bbev, w1s, w1a, b1, w2q, w2p, b2, w3, b3)

    return q[:B, 0:1], q[:B, 1:2]


def init_params(key, state_dim, action_dim, hidden):
    """Deterministic synthetic init. Weights stored (in_features, out_features)."""
    sa_dim = state_dim + action_dim
    layer_shapes = {
        "bev": (1000, hidden),
        "1": (sa_dim, hidden), "2": (2 * hidden, hidden), "3": (hidden, 1),
        "4": (sa_dim, hidden), "5": (2 * hidden, hidden), "6": (hidden, 1),
    }
    params = {}
    names = sorted(layer_shapes)
    keys = jax.random.split(key, 2 * len(names))
    for i, name in enumerate(names):
        in_f, out_f = layer_shapes[name]
        bound = 1.0 / math.sqrt(in_f)
        params["w" + name] = jax.random.uniform(
            keys[2 * i], (in_f, out_f), jnp.float32, -bound, bound)
        params["b" + name] = jax.random.uniform(
            keys[2 * i + 1], (1, out_f), jnp.float32, -bound, bound)
    return params


def critic_forward_ref(s, p, a, params):
    """Pure-JAX f32 reference matching the PyTorch module."""
    sa = jnp.concatenate([s, a], axis=-1)
    pf = p @ params["wbev"] + params["bbev"]
    h1 = jax.nn.relu(sa @ params["w1"] + params["b1"])
    h2 = jax.nn.relu(jnp.concatenate([h1, pf], -1) @ params["w2"] + params["b2"])
    q1 = h2 @ params["w3"] + params["b3"]
    g1 = jax.nn.relu(sa @ params["w4"] + params["b4"])
    g2 = jax.nn.relu(jnp.concatenate([g1, pf], -1) @ params["w5"] + params["b5"])
    q2 = g2 @ params["w6"] + params["b6"]
    return q1, q2


def critic_forward_ref_bf16(s, p, a, params):
    """Matched-precision reference (bf16 inputs/weights, f32 accumulation)."""
    bf16, f32 = jnp.bfloat16, jnp.float32

    def dot(x, w):
        return jnp.dot(x.astype(bf16), w.astype(bf16),
                       preferred_element_type=f32)

    sa = jnp.concatenate([s, a], axis=-1)
    pf = (dot(p, params["wbev"]) + params["bbev"]).astype(bf16)
    h1 = jax.nn.relu(dot(sa, params["w1"]) + params["b1"]).astype(bf16)
    h2 = jax.nn.relu(dot(jnp.concatenate([h1, pf], -1), params["w2"])
                     + params["b2"]).astype(bf16)
    q1 = dot(h2, params["w3"]) + params["b3"]
    g1 = jax.nn.relu(dot(sa, params["w4"]) + params["b4"]).astype(bf16)
    g2 = jax.nn.relu(dot(jnp.concatenate([g1, pf], -1), params["w5"])
                     + params["b5"]).astype(bf16)
    q2 = dot(g2, params["w6"]) + params["b6"]
    return q1, q2


if __name__ == "__main__":
    # Small shapes consistent with the module's forward.
    B, state_dim, action_dim, hidden = 8, 16, 8, 32

    key = jax.random.PRNGKey(0)
    k_s, k_p, k_a, k_w = jax.random.split(key, 4)
    s = jax.random.normal(k_s, (B, state_dim), jnp.float32)
    p = jax.random.normal(k_p, (B, 1000), jnp.float32)   # BEV feature -> Linear(1000, H)
    a = jax.random.normal(k_a, (B, action_dim), jnp.float32)

    params = init_params(k_w, state_dim, action_dim, hidden)

    fwd = jax.jit(critic_forward)
    q1, q2 = fwd(s, p, a, params)
    jax.block_until_ready((q1, q2))

    # Tight check against a matched-precision (bf16-input, f32-accum) reference.
    q1_bf, q2_bf = critic_forward_ref_bf16(s, p, a, params)
    assert jnp.allclose(q1, q1_bf, rtol=5e-3, atol=5e-3)
    assert jnp.allclose(q2, q2_bf, rtol=5e-3, atol=5e-3)

    # Semantic check against the full-f32 PyTorch-equivalent reference
    # (looser tolerance: bf16 input/weight rounding is an explicit perf choice).
    q1_ref, q2_ref = critic_forward_ref(s, p, a, params)
    assert jnp.allclose(q1, q1_ref, rtol=5e-2, atol=5e-2)
    assert jnp.allclose(q2, q2_ref, rtol=5e-2, atol=5e-2)

    print("KERNEL_OK")
</pallas_src>

<mosaic_0001>
module attributes {stable_mosaic.version = 11 : i64} {
  func.func @critic_kernel(%arg0: i32, %arg1: memref<8x16xbf16, #tpu.memory_space<vmem>>, %arg2: memref<8x8xbf16, #tpu.memory_space<vmem>>, %arg3: memref<8x1024xbf16, #tpu.memory_space<vmem>>, %arg4: memref<1024x32xbf16, #tpu.memory_space<vmem>>, %arg5: memref<1x32xf32, #tpu.memory_space<vmem>>, %arg6: memref<16x64xbf16, #tpu.memory_space<vmem>>, %arg7: memref<8x64xbf16, #tpu.memory_space<vmem>>, %arg8: memref<1x64xf32, #tpu.memory_space<vmem>>, %arg9: memref<64x64xbf16, #tpu.memory_space<vmem>>, %arg10: memref<32x64xbf16, #tpu.memory_space<vmem>>, %arg11: memref<1x64xf32, #tpu.memory_space<vmem>>, %arg12: memref<64x2xbf16, #tpu.memory_space<vmem>>, %arg13: memref<1x2xf32, #tpu.memory_space<vmem>>, %arg14: memref<8x2xf32, #tpu.memory_space<vmem>>) attributes {dimension_semantics = [#tpu.dimension_semantics<parallel>], iteration_bounds = array<i64: 1>, scalar_prefetch = 0 : i64, scratch_operands = 0 : i64, tpu.core_type = #tpu.core_type<tc>, window_params = [{transform_indices = @transform_0, window_bounds = array<i64: 8, 16>}, {transform_indices = @transform_1, window_bounds = array<i64: 8, 8>}, {transform_indices = @transform_2, window_bounds = array<i64: 8, 1024>}, {pipeline_mode = #tpu.pipeline_mode<synchronous>, transform_indices = @transform_3, window_bounds = array<i64: 1024, 32>}, {pipeline_mode = #tpu.pipeline_mode<synchronous>, transform_indices = @transform_4, window_bounds = array<i64: 1, 32>}, {pipeline_mode = #tpu.pipeline_mode<synchronous>, transform_indices = @transform_5, window_bounds = array<i64: 16, 64>}, {pipeline_mode = #tpu.pipeline_mode<synchronous>, transform_indices = @transform_6, window_bounds = array<i64: 8, 64>}, {pipeline_mode = #tpu.pipeline_mode<synchronous>, transform_indices = @transform_7, window_bounds = array<i64: 1, 64>}, {pipeline_mode = #tpu.pipeline_mode<synchronous>, transform_indices = @transform_8, window_bounds = array<i64: 64, 64>}, {pipeline_mode = #tpu.pipeline_mode<synchronous>, transform_indices = @transform_9, window_bounds = array<i64: 32, 64>}, {pipeline_mode = #tpu.pipeline_mode<synchronous>, transform_indices = @transform_10, window_bounds = array<i64: 1, 64>}, {pipeline_mode = #tpu.pipeline_mode<synchronous>, transform_indices = @transform_11, window_bounds = array<i64: 64, 2>}, {pipeline_mode = #tpu.pipeline_mode<synchronous>, transform_indices = @transform_12, window_bounds = array<i64: 1, 2>}, {transform_indices = @transform_13, window_bounds = array<i64: 8, 2>}]} {
    %c0 = arith.constant 0 : index
    %c0_0 = arith.constant 0 : index
    %0 = vector.load %arg3[%c0, %c0_0] : memref<8x1024xbf16, #tpu.memory_space<vmem>>, vector<8x1024xbf16>
    %c0_1 = arith.constant 0 : index
    %c0_2 = arith.constant 0 : index
    %1 = vector.load %arg4[%c0_1, %c0_2] : memref<1024x32xbf16, #tpu.memory_space<vmem>>, vector<1024x32xbf16>
    %cst = arith.constant dense<0.000000e+00> : vector<8x32xf32>
    %2 = tpu.matmul %0, %1, %cst {dimension_numbers = #tpu.dot_dimension_numbers<[1], [0], [0], [1], [0, 0, 1, 1], [], []>} : vector<8x1024xbf16>, vector<1024x32xbf16>, vector<8x32xf32> -> vector<8x32xf32>
    %c0_3 = arith.constant 0 : index
    %c0_4 = arith.constant 0 : index
    %3 = vector.load %arg5[%c0_3, %c0_4] : memref<1x32xf32, #tpu.memory_space<vmem>>, vector<1x32xf32>
    %4 = vector.broadcast %3 : vector<1x32xf32> to vector<8x32xf32>
    %5 = arith.addf %2, %4 : vector<8x32xf32>
    %6 = arith.truncf %5 : vector<8x32xf32> to vector<8x32xbf16>
    %c0_5 = arith.constant 0 : index
    %c0_6 = arith.constant 0 : index
    %7 = vector.load %arg1[%c0_5, %c0_6] : memref<8x16xbf16, #tpu.memory_space<vmem>>, vector<8x16xbf16>
    %c0_7 = arith.constant 0 : index
    %c0_8 = arith.constant 0 : index
    %8 = vector.load %arg6[%c0_7, %c0_8] : memref<16x64xbf16, #tpu.memory_space<vmem>>, vector<16x64xbf16>
    %cst_9 = arith.constant dense<0.000000e+00> : vector<8x64xf32>
    %9 = tpu.matmul %7, %8, %cst_9 {dimension_numbers = #tpu.dot_dimension_numbers<[1], [0], [0], [1], [0, 0, 1, 1], [], []>} : vector<8x16xbf16>, vector<16x64xbf16>, vector<8x64xf32> -> vector<8x64xf32>
    %c0_10 = arith.constant 0 : index
    %c0_11 = arith.constant 0 : index
    %10 = vector.load %arg2[%c0_10, %c0_11] : memref<8x8xbf16, #tpu.memory_space<vmem>>, vector<8x8xbf16>
    %c0_12 = arith.constant 0 : index
    %c0_13 = arith.constant 0 : index
    %11 = vector.load %arg7[%c0_12, %c0_13] : memref<8x64xbf16, #tpu.memory_space<vmem>>, vector<8x64xbf16>
    %cst_14 = arith.constant dense<0.000000e+00> : vector<8x64xf32>
    %12 = tpu.matmul %10, %11, %cst_14 {dimension_numbers = #tpu.dot_dimension_numbers<[1], [0], [0], [1], [0, 0, 1, 1], [], []>} : vector<8x8xbf16>, vector<8x64xbf16>, vector<8x64xf32> -> vector<8x64xf32>
    %13 = arith.addf %9, %12 : vector<8x64xf32>
    %c0_15 = arith.constant 0 : index
    %c0_16 = arith.constant 0 : index
    %14 = vector.load %arg8[%c0_15, %c0_16] : memref<1x64xf32, #tpu.memory_space<vmem>>, vector<1x64xf32>
    %15 = vector.broadcast %14 : vector<1x64xf32> to vector<8x64xf32>
    %16 = arith.addf %13, %15 : vector<8x64xf32>
    %cst_17 = arith.constant 0.000000e+00 : f32
    %17 = vector.broadcast %cst_17 : f32 to vector<8x64xf32>
    %18 = arith.maximumf %16, %17 : vector<8x64xf32>
    %19 = arith.truncf %18 : vector<8x64xf32> to vector<8x64xbf16>
    %c0_18 = arith.constant 0 : index
    %c0_19 = arith.constant 0 : index
    %20 = vector.load %arg9[%c0_18, %c0_19] : memref<64x64xbf16, #tpu.memory_space<vmem>>, vector<64x64xbf16>
    %cst_20 = arith.constant dense<0.000000e+00> : vector<8x64xf32>
    %21 = tpu.matmul %19, %20, %cst_20 {dimension_numbers = #tpu.dot_dimension_numbers<[1], [0], [0], [1], [0, 0, 1, 1], [], []>} : vector<8x64xbf16>, vector<64x64xbf16>, vector<8x64xf32> -> vector<8x64xf32>
    %c0_21 = arith.constant 0 : index
    %c0_22 = arith.constant 0 : index
    %22 = vector.load %arg10[%c0_21, %c0_22] : memref<32x64xbf16, #tpu.memory_space<vmem>>, vector<32x64xbf16>
    %cst_23 = arith.constant dense<0.000000e+00> : vector<8x64xf32>
    %23 = tpu.matmul %6, %22, %cst_23 {dimension_numbers = #tpu.dot_dimension_numbers<[1], [0], [0], [1], [0, 0, 1, 1], [], []>} : vector<8x32xbf16>, vector<32x64xbf16>, vector<8x64xf32> -> vector<8x64xf32>
    %24 = arith.addf %21, %23 : vector<8x64xf32>
    %c0_24 = arith.constant 0 : index
    %c0_25 = arith.constant 0 : index
    %25 = vector.load %arg11[%c0_24, %c0_25] : memref<1x64xf32, #tpu.memory_space<vmem>>, vector<1x64xf32>
    %26 = vector.broadcast %25 : vector<1x64xf32> to vector<8x64xf32>
    %27 = arith.addf %24, %26 : vector<8x64xf32>
    %cst_26 = arith.constant 0.000000e+00 : f32
    %28 = vector.broadcast %cst_26 : f32 to vector<8x64xf32>
    %29 = arith.maximumf %27, %28 : vector<8x64xf32>
    %30 = arith.truncf %29 : vector<8x64xf32> to vector<8x64xbf16>
    %c0_27 = arith.constant 0 : index
    %c0_28 = arith.constant 0 : index
    %31 = vector.load %arg12[%c0_27, %c0_28] : memref<64x2xbf16, #tpu.memory_space<vmem>>, vector<64x2xbf16>
    %cst_29 = arith.constant dense<0.000000e+00> : vector<8x2xf32>
    %32 = tpu.matmul %30, %31, %cst_29 {dimension_numbers = #tpu.dot_dimension_numbers<[1], [0], [0], [1], [0, 0, 1, 1], [], []>} : vector<8x64xbf16>, vector<64x2xbf16>, vector<8x2xf32> -> vector<8x2xf32>
    %c0_30 = arith.constant 0 : index
    %c0_31 = arith.constant 0 : index
    %33 = vector.load %arg13[%c0_30, %c0_31] : memref<1x2xf32, #tpu.memory_space<vmem>>, vector<1x2xf32>
    %34 = vector.broadcast %33 : vector<1x2xf32> to vector<8x2xf32>
    %35 = arith.addf %32, %34 : vector<8x2xf32>
    %c0_32 = arith.constant 0 : index
    %c0_33 = arith.constant 0 : index
    %36 = vector.load %arg14[%c0_32, %c0_33] : memref<8x2xf32, #tpu.memory_space<vmem>>, vector<8x2xf32>
    tpu.vector_store %arg14[%c0_32, %c0_33], %35 {strides = array<i32>} : memref<8x2xf32, #tpu.memory_space<vmem>>, vector<8x2xf32>,
    return
  }
  func.func @transform_0(%arg0: i32) -> (i32, i32) {
    %c0_i32 = arith.constant 0 : i32
    %c0_i32_0 = arith.constant 0 : i32
    return %arg0, %c0_i32 : i32, i32
  }
  func.func @transform_1(%arg0: i32) -> (i32, i32) {
    %c0_i32 = arith.constant 0 : i32
    %c0_i32_0 = arith.constant 0 : i32
    return %arg0, %c0_i32 : i32, i32
  }
  func.func @transform_2(%arg0: i32) -> (i32, i32) {
    %c0_i32 = arith.constant 0 : i32
    %c0_i32_0 = arith.constant 0 : i32
    return %arg0, %c0_i32 : i32, i32
  }
  func.func @transform_3(%arg0: i32) -> (i32, i32) {
    %c0_i32 = arith.constant 0 : i32
    %c0_i32_0 = arith.constant 0 : i32
    %c0_i32_1 = arith.constant 0 : i32
    return %c0_i32, %c0_i32_0 : i32, i32
  }
  func.func @transform_4(%arg0: i32) -> (i32, i32) {
    %c0_i32 = arith.constant 0 : i32
    %c0_i32_0 = arith.constant 0 : i32
    %c0_i32_1 = arith.constant 0 : i32
    return %c0_i32, %c0_i32_0 : i32, i32
  }
  func.func @transform_5(%arg0: i32) -> (i32, i32) {
    %c0_i32 = arith.constant 0 : i32
    %c0_i32_0 = arith.constant 0 : i32
    %c0_i32_1 = arith.constant 0 : i32
    return %c0_i32, %c0_i32_0 : i32, i32
  }
  func.func @transform_6(%arg0: i32) -> (i32, i32) {
    %c0_i32 = arith.constant 0 : i32
    %c0_i32_0 = arith.constant 0 : i32
    %c0_i32_1 = arith.constant 0 : i32
    return %c0_i32, %c0_i32_0 : i32, i32
  }
  func.func @transform_7(%arg0: i32) -> (i32, i32) {
    %c0_i32 = arith.constant 0 : i32
    %c0_i32_0 = arith.constant 0 : i32
    %c0_i32_1 = arith.constant 0 : i32
    return %c0_i32, %c0_i32_0 : i32, i32
  }
  func.func @transform_8(%arg0: i32) -> (i32, i32) {
    %c0_i32 = arith.constant 0 : i32
    %c0_i32_0 = arith.constant 0 : i32
    %c0_i32_1 = arith.constant 0 : i32
    return %c0_i32, %c0_i32_0 : i32, i32
  }
  func.func @transform_9(%arg0: i32) -> (i32, i32) {
    %c0_i32 = arith.constant 0 : i32
    %c0_i32_0 = arith.constant 0 : i32
    %c0_i32_1 = arith.constant 0 : i32
    return %c0_i32, %c0_i32_0 : i32, i32
  }
  func.func @transform_10(%arg0: i32) -> (i32, i32) {
    %c0_i32 = arith.constant 0 : i32
    %c0_i32_0 = arith.constant 0 : i32
    %c0_i32_1 = arith.constant 0 : i32
    return %c0_i32, %c0_i32_0 : i32, i32
  }
  func.func @transform_11(%arg0: i32) -> (i32, i32) {
    %c0_i32 = arith.constant 0 : i32
    %c0_i32_0 = arith.constant 0 : i32
    %c0_i32_1 = arith.constant 0 : i32
    return %c0_i32, %c0_i32_0 : i32, i32
  }
  func.func @transform_12(%arg0: i32) -> (i32, i32) {
    %c0_i32 = arith.constant 0 : i32
    %c0_i32_0 = arith.constant 0 : i32
    %c0_i32_1 = arith.constant 0 : i32
    return %c0_i32, %c0_i32_0 : i32, i32
  }
  func.func @transform_13(%arg0: i32) -> (i32, i32) {
    %c0_i32 = arith.constant 0 : i32
    %c0_i32_0 = arith.constant 0 : i32
    return %arg0, %c0_i32 : i32, i32
  }
}

</mosaic_0001>

<llo_original>
// kernel: critic_forward.1
$region0: #{critic_forward.1}
  #allocation0 [shape = 'u32[]', space=smem, size = 0x4, offset = 0x4, fixed_abs, tag = 'smem constant byte address 0x4 - core index']
  #allocation1 [shape = 'u32[144,128]{1,0:T(1,128)}', space=vmem, size = 0x12000, scoped, tag = 'internal scratch']
  %s0 = inlined_call_operand.vmem [shape: bf16[8,16], index: 0, kind: input, shape index: {}]
  %s1 = inlined_call_operand.vmem [shape: bf16[8,8], index: 1, kind: input, shape index: {}]
  %s2 = inlined_call_operand.vmem [shape: bf16[8,1024], index: 2, kind: input, shape index: {}]
  %s3 = inlined_call_operand.vmem [shape: bf16[1024,32], index: 3, kind: input, shape index: {}]
  %s4 = inlined_call_operand.vmem [shape: f32[1,32], index: 4, kind: input, shape index: {}]
  %s5 = inlined_call_operand.vmem [shape: bf16[16,64], index: 5, kind: input, shape index: {}]
  %s6 = inlined_call_operand.vmem [shape: bf16[8,64], index: 6, kind: input, shape index: {}]
  %s7 = inlined_call_operand.vmem [shape: f32[1,64], index: 7, kind: input, shape index: {}]
  %s8 = inlined_call_operand.vmem [shape: bf16[64,64], index: 8, kind: input, shape index: {}]
  %s9 = inlined_call_operand.vmem [shape: bf16[32,64], index: 9, kind: input, shape index: {}]
  %s10 = inlined_call_operand.vmem [shape: f32[1,64], index: 10, kind: input, shape index: {}]
  %s11 = inlined_call_operand.vmem [shape: bf16[64,2], index: 11, kind: input, shape index: {}]
  %s12 = inlined_call_operand.vmem [shape: f32[1,2], index: 12, kind: input, shape index: {}]
  %s13 = inlined_call_operand.vmem [shape: f32[8,2], index: 13, kind: output, shape index: {}]
  %s14 = sld [smem:[#allocation0]]
  $region62: #{critic_forward.1} parent=0
    _
  %s16 = ssub.s32 1, %s14
  %s17 = scalar_select 0, %s16, %s14
  // Predicated region
  $region2: #{critic_forward.1} parent=0 // pred_check
    _
  $region3: #{critic_forward.1} parent=0 // pred_check_branch
    %19 = sbr.rel (0) target = $region5
  $region4: #{critic_forward.1} parent=0 // pred_region
    _
  $region5: #{critic_forward.1} parent=0 // pred_fallthru
    _
  // Predicated region
  $region6: #{critic_forward.1} parent=0 // pred_check
    _
  $region7: #{critic_forward.1} parent=0 // pred_check_branch
    %21 = sbr.rel (0) target = $region9
  $region8: #{critic_forward.1} parent=0 // pred_region
    _
  $region9: #{critic_forward.1} parent=0 // pred_fallthru
    _
  // Predicated region
  $region10: #{critic_forward.1} parent=0 // pred_check
    _
  $region11: #{critic_forward.1} parent=0 // pred_check_branch
    %23 = sbr.rel (0) target = $region13
  $region12: #{critic_forward.1} parent=0 // pred_region
    _
  $region13: #{critic_forward.1} parent=0 // pred_fallthru
    _
  // Predicated region
  $region14: #{critic_forward.1} parent=0 // pred_check
    _
  $region15: #{critic_forward.1} parent=0 // pred_check_branch
    %25 = sbr.rel (0) target = $region17
  $region16: #{critic_forward.1} parent=0 // pred_region
    _
  $region17: #{critic_forward.1} parent=0 // pred_fallthru
    _
  // Predicated region
  $region18: #{critic_forward.1} parent=0 // pred_check
    _
  $region19: #{critic_forward.1} parent=0 // pred_check_branch
    %27 = sbr.rel (0) target = $region21
  $region20: #{critic_forward.1} parent=0 // pred_region
    _
  $region21: #{critic_forward.1} parent=0 // pred_fallthru
    _
  // Predicated region
  $region22: #{critic_forward.1} parent=0 // pred_check
    _
  $region23: #{critic_forward.1} parent=0 // pred_check_branch
    %29 = sbr.rel (0) target = $region25
  $region24: #{critic_forward.1} parent=0 // pred_region
    _
  $region25: #{critic_forward.1} parent=0 // pred_fallthru
    _
  // Predicated region
  $region26: #{critic_forward.1} parent=0 // pred_check
    _
  $region27: #{critic_forward.1} parent=0 // pred_check_branch
    %31 = sbr.rel (0) target = $region29
  $region28: #{critic_forward.1} parent=0 // pred_region
    _
  $region29: #{critic_forward.1} parent=0 // pred_fallthru
    _
  // Predicated region
  $region30: #{critic_forward.1} parent=0 // pred_check
    _
  $region31: #{critic_forward.1} parent=0 // pred_check_branch
    %33 = sbr.rel (0) target = $region33
  $region32: #{critic_forward.1} parent=0 // pred_region
    _
  $region33: #{critic_forward.1} parent=0 // pred_fallthru
    _
  // Predicated region
  $region34: #{critic_forward.1} parent=0 // pred_check
    _
  $region35: #{critic_forward.1} parent=0 // pred_check_branch
    %35 = sbr.rel (0) target = $region37
  $region36: #{critic_forward.1} parent=0 // pred_region
    _
  $region37: #{critic_forward.1} parent=0 // pred_fallthru
    _
  // Predicated region
  $region38: #{critic_forward.1} parent=0 // pred_check
    _
  $region39: #{critic_forward.1} parent=0 // pred_check_branch
    %37 = sbr.rel (0) target = $region41
  $region40: #{critic_forward.1} parent=0 // pred_region
    _
  $region41: #{critic_forward.1} parent=0 // pred_fallthru
    _
  // Predicated region
  $region42: #{critic_forward.1} parent=0 // pred_check
    _
  $region43: #{critic_forward.1} parent=0 // pred_check_branch
    %39 = sbr.rel (0) target = $region45
  $region44: #{critic_forward.1} parent=0 // pred_region
    _
  $region45: #{critic_forward.1} parent=0 // pred_fallthru
    _
  // Predicated region
  $region46: #{critic_forward.1} parent=0 // pred_check
    _
  $region47: #{critic_forward.1} parent=0 // pred_check_branch
    %41 = sbr.rel (0) target = $region49
  $region48: #{critic_forward.1} parent=0 // pred_region
    _
  $region49: #{critic_forward.1} parent=0 // pred_fallthru
    _
  // Predicated region
  $region50: #{critic_forward.1} parent=0 // pred_check
    _
  $region51: #{critic_forward.1} parent=0 // pred_check_branch
    %43 = sbr.rel (0) target = $region53
  $region52: #{critic_forward.1} parent=0 // pred_region
    _
  $region53: #{critic_forward.1} parent=0 // pred_fallthru
    _
  %v45 = vld [vmem:[%s2] sm:$0xff]
  %v46 = vld [vmem:[%s2 + $0x8] sm:$0xff]
  %v47 = vld [vmem:[%s2 + $0x10] sm:$0xff]
  %v48 = vld [vmem:[%s2 + $0x18] sm:$0xff]
  %v49 = vld [vmem:[%s3] sm:$0xf]
  %v50 = vld [vmem:[%s3 + $0x4] sm:$0xf]
  %v51 = vld [vmem:[%s3 + $0x8] sm:$0xf]
  %v52 = vld [vmem:[%s3 + $0xc] sm:$0xf]
  %v53 = vld [vmem:[%s3 + $0x10] sm:$0xf]
  %v54 = vld [vmem:[%s3 + $0x14] sm:$0xf]
  %v55 = vld [vmem:[%s3 + $0x18] sm:$0xf]
  %v56 = vld [vmem:[%s3 + $0x1c] sm:$0xf]
  %v57 = vld [vmem:[%s3 + $0x20] sm:$0xf]
  %v58 = vld [vmem:[%s3 + $0x24] sm:$0xf]
  %v59 = vld [vmem:[%s3 + $0x28] sm:$0xf]
  %v60 = vld [vmem:[%s3 + $0x2c] sm:$0xf]
  %v61 = vld [vmem:[%s3 + $0x30] sm:$0xf]
  %v62 = vld [vmem:[%s3 + $0x34] sm:$0xf]
  %v63 = vld [vmem:[%s3 + $0x38] sm:$0xf]
  %v64 = vld [vmem:[%s3 + $0x3c] sm:$0xf]
  %v65 = vld [vmem:[%s3 + $0x40] sm:$0xf]
  %v66 = vld [vmem:[%s3 + $0x44] sm:$0xf]
  %v67 = vld [vmem:[%s3 + $0x48] sm:$0xf]
  %v68 = vld [vmem:[%s3 + $0x4c] sm:$0xf]
  %v69 = vld [vmem:[%s3 + $0x50] sm:$0xf]
  %v70 = vld [vmem:[%s3 + $0x54] sm:$0xf]
  %v71 = vld [vmem:[%s3 + $0x58] sm:$0xf]
  %v72 = vld [vmem:[%s3 + $0x5c] sm:$0xf]
  %v73 = vld [vmem:[%s3 + $0x60] sm:$0xf]
  %v74 = vld [vmem:[%s3 + $0x64] sm:$0xf]
  %v75 = vld [vmem:[%s3 + $0x68] sm:$0xf]
  %v76 = vld [vmem:[%s3 + $0x6c] sm:$0xf]
  %v77 = vld [vmem:[%s3 + $0x70] sm:$0xf]
  %v78 = vld [vmem:[%s3 + $0x74] sm:$0xf]
  %v79 = vld [vmem:[%s3 + $0x78] sm:$0xf]
  %v80 = vld [vmem:[%s3 + $0x7c] sm:$0xf]
  %v81 = vld [vmem:[%s3 + $0x80] sm:$0xf]
  %v82 = vld [vmem:[%s3 + $0x84] sm:$0xf]
  %v83 = vld [vmem:[%s3 + $0x88] sm:$0xf]
  %v84 = vld [vmem:[%s3 + $0x8c] sm:$0xf]
  %v85 = vld [vmem:[%s3 + $0x90] sm:$0xf]
  %v86 = vld [vmem:[%s3 + $0x94] sm:$0xf]
  %v87 = vld [vmem:[%s3 + $0x98] sm:$0xf]
  %v88 = vld [vmem:[%s3 + $0x9c] sm:$0xf]
  %v89 = vld [vmem:[%s3 + $0xa0] sm:$0xf]
  %v90 = vld [vmem:[%s3 + $0xa4] sm:$0xf]
  %v91 = vld [vmem:[%s3 + $0xa8] sm:$0xf]
  %v92 = vld [vmem:[%s3 + $0xac] sm:$0xf]
  %v93 = vld [vmem:[%s3 + $0xb0] sm:$0xf]
  %v94 = vld [vmem:[%s3 + $0xb4] sm:$0xf]
  %v95 = vld [vmem:[%s3 + $0xb8] sm:$0xf]
  %v96 = vld [vmem:[%s3 + $0xbc] sm:$0xf]
  %v97 = vld [vmem:[%s3 + $0xc0] sm:$0xf]
  %v98 = vld [vmem:[%s3 + $0xc4] sm:$0xf]
  %v99 = vld [vmem:[%s3 + $0xc8] sm:$0xf]
  %v100 = vld [vmem:[%s3 + $0xcc] sm:$0xf]
  %v101 = vld [vmem:[%s3 + $0xd0] sm:$0xf]
  %v102 = vld [vmem:[%s3 + $0xd4] sm:$0xf]
  %v103 = vld [vmem:[%s3 + $0xd8] sm:$0xf]
  %v104 = vld [vmem:[%s3 + $0xdc] sm:$0xf]
  %v105 = vld [vmem:[%s3 + $0xe0] sm:$0xf]
  %v106 = vld [vmem:[%s3 + $0xe4] sm:$0xf]
  %v107 = vld [vmem:[%s3 + $0xe8] sm:$0xf]
  %v108 = vld [vmem:[%s3 + $0xec] sm:$0xf]
  %v109 = vld [vmem:[%s3 + $0xf0] sm:$0xf]
  %v110 = vld [vmem:[%s3 + $0xf4] sm:$0xf]
  %v111 = vld [vmem:[%s3 + $0xf8] sm:$0xf]
  %v112 = vld [vmem:[%s3 + $0xfc] sm:$0xf]
  %v113 = vld [vmem:[%s3 + $0x100] sm:$0xf]
  %v114 = vld [vmem:[%s3 + $0x104] sm:$0xf]
  %v115 = vld [vmem:[%s3 + $0x108] sm:$0xf]
  %v116 = vld [vmem:[%s3 + $0x10c] sm:$0xf]
  %v117 = vld [vmem:[%s3 + $0x110] sm:$0xf]
  %v118 = vld [vmem:[%s3 + $0x114] sm:$0xf]
  %v119 = vld [vmem:[%s3 + $0x118] sm:$0xf]
  %v120 = vld [vmem:[%s3 + $0x11c] sm:$0xf]
  %v121 = vld [vmem:[%s3 + $0x120] sm:$0xf]
  %v122 = vld [vmem:[%s3 + $0x124] sm:$0xf]
  %v123 = vld [vmem:[%s3 + $0x128] sm:$0xf]
  %v124 = vld [vmem:[%s3 + $0x12c] sm:$0xf]
  %v125 = vld [vmem:[%s3 + $0x130] sm:$0xf]
  %v126 = vld [vmem:[%s3 + $0x134] sm:$0xf]
  %v127 = vld [vmem:[%s3 + $0x138] sm:$0xf]
  %v128 = vld [vmem:[%s3 + $0x13c] sm:$0xf]
  %v129 = vld [vmem:[%s3 + $0x140] sm:$0xf]
  %v130 = vld [vmem:[%s3 + $0x144] sm:$0xf]
  %v131 = vld [vmem:[%s3 + $0x148] sm:$0xf]
  %v132 = vld [vmem:[%s3 + $0x14c] sm:$0xf]
  %v133 = vld [vmem:[%s3 + $0x150] sm:$0xf]
  %v134 = vld [vmem:[%s3 + $0x154] sm:$0xf]
  %v135 = vld [vmem:[%s3 + $0x158] sm:$0xf]
  %v136 = vld [vmem:[%s3 + $0x15c] sm:$0xf]
  %v137 = vld [vmem:[%s3 + $0x160] sm:$0xf]
  %v138 = vld [vmem:[%s3 + $0x164] sm:$0xf]
  %v139 = vld [vmem:[%s3 + $0x168] sm:$0xf]
  %v140 = vld [vmem:[%s3 + $0x16c] sm:$0xf]
  %v141 = vld [vmem:[%s3 + $0x170] sm:$0xf]
  %v142 = vld [vmem:[%s3 + $0x174] sm:$0xf]
  %v143 = vld [vmem:[%s3 + $0x178] sm:$0xf]
  %v144 = vld [vmem:[%s3 + $0x17c] sm:$0xf]
  %v145 = vld [vmem:[%s3 + $0x180] sm:$0xf]
  %v146 = vld [vmem:[%s3 + $0x184] sm:$0xf]
  %v147 = vld [vmem:[%s3 + $0x188] sm:$0xf]
  %v148 = vld [vmem:[%s3 + $0x18c] sm:$0xf]
  %v149 = vld [vmem:[%s3 + $0x190] sm:$0xf]
  %v150 = vld [vmem:[%s3 + $0x194] sm:$0xf]
  %v151 = vld [vmem:[%s3 + $0x198] sm:$0xf]
  %v152 = vld [vmem:[%s3 + $0x19c] sm:$0xf]
  %v153 = vld [vmem:[%s3 + $0x1a0] sm:$0xf]
  %v154 = vld [vmem:[%s3 + $0x1a4] sm:$0xf]
  %v155 = vld [vmem:[%s3 + $0x1a8] sm:$0xf]
  %v156 = vld [vmem:[%s3 + $0x1ac] sm:$0xf]
  %v157 = vld [vmem:[%s3 + $0x1b0] sm:$0xf]
  %v158 = vld [vmem:[%s3 + $0x1b4] sm:$0xf]
  %v159 = vld [vmem:[%s3 + $0x1b8] sm:$0xf]
  %v160 = vld [vmem:[%s3 + $0x1bc] sm:$0xf]
  %v161 = vld [vmem:[%s3 + $0x1c0] sm:$0xf]
  %v162 = vld [vmem:[%s3 + $0x1c4] sm:$0xf]
  %v163 = vld [vmem:[%s3 + $0x1c8] sm:$0xf]
  %v164 = vld [vmem:[%s3 + $0x1cc] sm:$0xf]
  %v165 = vld [vmem:[%s3 + $0x1d0] sm:$0xf]
  %v166 = vld [vmem:[%s3 + $0x1d4] sm:$0xf]
  %v167 = vld [vmem:[%s3 + $0x1d8] sm:$0xf]
  %v168 = vld [vmem:[%s3 + $0x1dc] sm:$0xf]
  %v169 = vld [vmem:[%s3 + $0x1e0] sm:$0xf]
  %v170 = vld [vmem:[%s3 + $0x1e4] sm:$0xf]
  %v171 = vld [vmem:[%s3 + $0x1e8] sm:$0xf]
  %v172 = vld [vmem:[%s3 + $0x1ec] sm:$0xf]
  %v173 = vld [vmem:[%s3 + $0x1f0] sm:$0xf]
  %v174 = vld [vmem:[%s3 + $0x1f4] sm:$0xf]
  %v175 = vld [vmem:[%s3 + $0x1f8] sm:$0xf]
  %v176 = vld [vmem:[%s3 + $0x1fc] sm:$0xf]
  %v177 = vld [vmem:[%s4] sm:$0x1]
  %v179 = vlaneseq
  %v180 = vshrl.u32 %v179, 7
  %v181 = vsub.s32 0, %v180
  %v182 = vrot.slane %v177, %v181
  %v188 = vunpack.c.l.b16 %v45
  %v189 = vunpack.c.h.b16 %v45
  %v190 = vunpack.c.l.b16 %v46
  %v191 = vunpack.c.h.b16 %v46
  %v192 = vunpack.c.l.b16 %v47
  %v193 = vunpack.c.h.b16 %v47
  %v194 = vunpack.c.l.b16 %v48
  %v195 = vunpack.c.h.b16 %v48
  %v196 = vpack.c.b16 %v188, %v188
  %v197 = vpack.c.b16 %v189, %v189
  %v198 = vpack.c.b16 %v190, %v190
  %v199 = vpack.c.b16 %v191, %v191
  %v200 = vpack.c.b16 %v192, %v192
  %v201 = vpack.c.b16 %v193, %v193
  %v202 = vpack.c.b16 %v194, %v194
  %v203 = vpack.c.b16 %v195, %v195
  %v340 = vunpack.c.l.b16 %v49
  %v341 = vunpack.c.l.b16 %v50
  %v342 = vunpack.c.l.b16 %v51
  %v343 = vunpack.c.l.b16 %v52
  %v344 = vunpack.c.l.b16 %v53
  %v345 = vunpack.c.l.b16 %v54
  %v346 = vunpack.c.l.b16 %v55
  %v347 = vunpack.c.l.b16 %v56
  %v348 = vunpack.c.l.b16 %v57
  %v349 = vunpack.c.l.b16 %v58
  %v350 = vunpack.c.l.b16 %v59
  %v351 = vunpack.c.l.b16 %v60
  %v352 = vunpack.c.l.b16 %v61
  %v353 = vunpack.c.l.b16 %v62
  %v354 = vunpack.c.l.b16 %v63
  %v355 = vunpack.c.l.b16 %v64
  %v356 = vunpack.c.l.b16 %v65
  %v357 = vunpack.c.l.b16 %v66
  %v358 = vunpack.c.l.b16 %v67
  %v359 = vunpack.c.l.b16 %v68
  %v360 = vunpack.c.l.b16 %v69
  %v361 = vunpack.c.l.b16 %v70
  %v362 = vunpack.c.l.b16 %v71
  %v363 = vunpack.c.l.b16 %v72
  %v364 = vunpack.c.l.b16 %v73
  %v365 = vunpack.c.l.b16 %v74
  %v366 = vunpack.c.l.b16 %v75
  %v367 = vunpack.c.l.b16 %v76
  %v368 = vunpack.c.l.b16 %v77
  %v369 = vunpack.c.l.b16 %v78
  %v370 = vunpack.c.l.b16 %v79
  %v371 = vunpack.c.l.b16 %v80
  %v372 = vunpack.c.l.b16 %v81
  %v373 = vunpack.c.l.b16 %v82
  %v374 = vunpack.c.l.b16 %v83
  %v375 = vunpack.c.l.b16 %v84
  %v376 = vunpack.c.l.b16 %v85
  %v377 = vunpack.c.l.b16 %v86
  %v378 = vunpack.c.l.b16 %v87
  %v379 = vunpack.c.l.b16 %v88
  %v380 = vunpack.c.l.b16 %v89
  %v381 = vunpack.c.l.b16 %v90
  %v382 = vunpack.c.l.b16 %v91
  %v383 = vunpack.c.l.b16 %v92
  %v384 = vunpack.c.l.b16 %v93
  %v385 = vunpack.c.l.b16 %v94
  %v386 = vunpack.c.l.b16 %v95
  %v387 = vunpack.c.l.b16 %v96
  %v388 = vunpack.c.l.b16 %v97
  %v389 = vunpack.c.l.b16 %v98
  %v390 = vunpack.c.l.b16 %v99
  %v391 = vunpack.c.l.b16 %v100
  %v392 = vunpack.c.l.b16 %v101
  %v393 = vunpack.c.l.b16 %v102
  %v394 = vunpack.c.l.b16 %v103
  %v395 = vunpack.c.l.b16 %v104
  %v396 = vunpack.c.l.b16 %v105
  %v397 = vunpack.c.l.b16 %v106
  %v398 = vunpack.c.l.b16 %v107
  %v399 = vunpack.c.l.b16 %v108
  %v400 = vunpack.c.l.b16 %v109
  %v401 = vunpack.c.l.b16 %v110
  %v402 = vunpack.c.l.b16 %v111
  %v403 = vunpack.c.l.b16 %v112
  %v404 = vunpack.c.l.b16 %v113
  %v405 = vunpack.c.l.b16 %v114
  %v406 = vunpack.c.l.b16 %v115
  %v407 = vunpack.c.l.b16 %v116
  %v408 = vunpack.c.l.b16 %v117
  %v409 = vunpack.c.l.b16 %v118
  %v410 = vunpack.c.l.b16 %v119
  %v411 = vunpack.c.l.b16 %v120
  %v412 = vunpack.c.l.b16 %v121
  %v413 = vunpack.c.l.b16 %v122
  %v414 = vunpack.c.l.b16 %v123
  %v415 = vunpack.c.l.b16 %v124
  %v416 = vunpack.c.l.b16 %v125
  %v417 = vunpack.c.l.b16 %v126
  %v418 = vunpack.c.l.b16 %v127
  %v419 = vunpack.c.l.b16 %v128
  %v420 = vunpack.c.l.b16 %v129
  %v421 = vunpack.c.l.b16 %v130
  %v422 = vunpack.c.l.b16 %v131
  %v423 = vunpack.c.l.b16 %v132
  %v424 = vunpack.c.l.b16 %v133
  %v425 = vunpack.c.l.b16 %v134
  %v426 = vunpack.c.l.b16 %v135
  %v427 = vunpack.c.l.b16 %v136
  %v428 = vunpack.c.l.b16 %v137
  %v429 = vunpack.c.l.b16 %v138
  %v430 = vunpack.c.l.b16 %v139
  %v431 = vunpack.c.l.b16 %v140
  %v432 = vunpack.c.l.b16 %v141
  %v433 = vunpack.c.l.b16 %v142
  %v434 = vunpack.c.l.b16 %v143
  %v435 = vunpack.c.l.b16 %v144
  %v436 = vunpack.c.l.b16 %v145
  %v437 = vunpack.c.l.b16 %v146
  %v438 = vunpack.c.l.b16 %v147
  %v439 = vunpack.c.l.b16 %v148
  %v440 = vunpack.c.l.b16 %v149
  %v441 = vunpack.c.l.b16 %v150
  %v442 = vunpack.c.l.b16 %v151
  %v443 = vunpack.c.l.b16 %v152
  %v444 = vunpack.c.l.b16 %v153
  %v445 = vunpack.c.l.b16 %v154
  %v446 = vunpack.c.l.b16 %v155
  %v447 = vunpack.c.l.b16 %v156
  %v448 = vunpack.c.l.b16 %v157
  %v449 = vunpack.c.l.b16 %v158
  %v450 = vunpack.c.l.b16 %v159
  %v451 = vunpack.c.l.b16 %v160
  %v452 = vunpack.c.l.b16 %v161
  %v453 = vunpack.c.l.b16 %v162
  %v454 = vunpack.c.l.b16 %v163
  %v455 = vunpack.c.l.b16 %v164
  %v456 = vunpack.c.l.b16 %v165
  %v457 = vunpack.c.l.b16 %v166
  %v458 = vunpack.c.l.b16 %v167
  %v459 = vunpack.c.l.b16 %v168
  %v460 = vunpack.c.l.b16 %v169
  %v461 = vunpack.c.l.b16 %v170
  %v462 = vunpack.c.l.b16 %v171
  %v463 = vunpack.c.l.b16 %v172
  %v464 = vunpack.c.l.b16 %v173
  %v465 = vunpack.c.l.b16 %v174
  %v466 = vunpack.c.l.b16 %v175
  %v467 = vunpack.c.l.b16 %v176
  %v468 = vpack.c.b16 %v341, %v340
  %v469 = vpack.c.b16 %v343, %v342
  %v470 = vpack.c.b16 %v345, %v344
  %v471 = vpack.c.b16 %v347, %v346
  %v472 = vpack.c.b16 %v349, %v348
  %v473 = vpack.c.b16 %v351, %v350
  %v474 = vpack.c.b16 %v353, %v352
  %v475 = vpack.c.b16 %v355, %v354
  %v476 = vpack.c.b16 %v357, %v356
  %v477 = vpack.c.b16 %v359, %v358
  %v478 = vpack.c.b16 %v361, %v360
  %v479 = vpack.c.b16 %v363, %v362
  %v480 = vpack.c.b16 %v365, %v364
  %v481 = vpack.c.b16 %v367, %v366
  %v482 = vpack.c.b16 %v369, %v368
  %v483 = vpack.c.b16 %v371, %v370
  %v484 = vpack.c.b16 %v373, %v372
  %v485 = vpack.c.b16 %v375, %v374
  %v486 = vpack.c.b16 %v377, %v376
  %v487 = vpack.c.b16 %v379, %v378
  %v488 = vpack.c.b16 %v381, %v380
  %v489 = vpack.c.b16 %v383, %v382
  %v490 = vpack.c.b16 %v385, %v384
  %v491 = vpack.c.b16 %v387, %v386
  %v492 = vpack.c.b16 %v389, %v388
  %v493 = vpack.c.b16 %v391, %v390
  %v494 = vpack.c.b16 %v393, %v392
  %v495 = vpack.c.b16 %v395, %v394
  %v496 = vpack.c.b16 %v397, %v396
  %v497 = vpack.c.b16 %v399, %v398
  %v498 = vpack.c.b16 %v401, %v400
  %v499 = vpack.c.b16 %v403, %v402
  %v500 = vpack.c.b16 %v405, %v404
  %v501 = vpack.c.b16 %v407, %v406
  %v502 = vpack.c.b16 %v409, %v408
  %v503 = vpack.c.b16 %v411, %v410
  %v504 = vpack.c.b16 %v413, %v412
  %v505 = vpack.c.b16 %v415, %v414
  %v506 = vpack.c.b16 %v417, %v416
  %v507 = vpack.c.b16 %v419, %v418
  %v508 = vpack.c.b16 %v421, %v420
  %v509 = vpack.c.b16 %v423, %v422
  %v510 = vpack.c.b16 %v425, %v424
  %v511 = vpack.c.b16 %v427, %v426
  %v512 = vpack.c.b16 %v429, %v428
  %v513 = vpack.c.b16 %v431, %v430
  %v514 = vpack.c.b16 %v433, %v432
  %v515 = vpack.c.b16 %v435, %v434
  %v516 = vpack.c.b16 %v437, %v436
  %v517 = vpack.c.b16 %v439, %v438
  %v518 = vpack.c.b16 %v441, %v440
  %v519 = vpack.c.b16 %v443, %v442
  %v520 = vpack.c.b16 %v445, %v444
  %v521 = vpack.c.b16 %v447, %v446
  %v522 = vpack.c.b16 %v449, %v448
  %v523 = vpack.c.b16 %v451, %v450
  %v524 = vpack.c.b16 %v453, %v452
  %v525 = vpack.c.b16 %v455, %v454
  %v526 = vpack.c.b16 %v457, %v456
  %v527 = vpack.c.b16 %v459, %v458
  %v528 = vpack.c.b16 %v461, %v460
  %v529 = vpack.c.b16 %v463, %v462
  %v530 = vpack.c.b16 %v465, %v464
  %v531 = vpack.c.b16 %v467, %v466
  %596 = vmatprep.subr.bf16.mxu0 0
  %597 = vmatpush1.bf16.msra.mxu0 %v475
  %598 = vmatprep.subr.bf16.mxu0 0
  %599 = vmatpush1.bf16.msra.mxu0 %v474
  %600 = vmatprep.subr.bf16.mxu0 0
  %601 = vmatpush1.bf16.msra.mxu0 %v473
  %602 = vmatprep.subr.bf16.mxu0 0
  %603 = vmatpush1.bf16.msra.mxu0 %v472
  %604 = vmatprep.subr.bf16.mxu0 0
  %605 = vmatpush1.bf16.msra.mxu0 %v471
  %606 = vmatprep.subr.bf16.mxu0 0
  %607 = vmatpush1.bf16.msra.mxu0 %v470
  %608 = vmatprep.subr.bf16.mxu0 0
  %609 = vmatpush1.bf16.msra.mxu0 %v469
  %610 = vmatprep.subr.bf16.mxu0 0
  %611 = vmatpush1.bf16.msra.mxu0 %v468
  %612 = vmatprep.subr.bf16.mxu0 0
  %613 = vmatpush2.bf16.msra.mxu0 %v483
  %614 = vmatprep.subr.bf16.mxu0 0
  %615 = vmatpush2.bf16.msra.mxu0 %v482
  %616 = vmatprep.subr.bf16.mxu0 0
  %617 = vmatpush2.bf16.msra.mxu0 %v481
  %618 = vmatprep.subr.bf16.mxu0 0
  %619 = vmatpush2.bf16.msra.mxu0 %v480
  %620 = vmatprep.subr.bf16.mxu0 0
  %621 = vmatpush2.bf16.msra.mxu0 %v479
  %622 = vmatprep.subr.bf16.mxu0 0
  %623 = vmatpush2.bf16.msra.mxu0 %v478
  %624 = vmatprep.subr.bf16.mxu0 0
  %625 = vmatpush2.bf16.msra.mxu0 %v477
  %626 = vmatprep.subr.bf16.mxu0 0
  %627 = vmatpush2.bf16.msra.mxu0 %v476
  %628 = vmatprep.mubr.bf16.mxu0 %v197
  %629 = vmatmul.mubr.bf16.gmra.mxu0 %v196
  %v630 = vpop.f32.mrf.mxu0
  %v631 = vadd.f32 %v182, %v630
  %v632 = vpop.f32.mrf.mxu0
  %v633 = vpop.f32.mrf.mxu0
  %v634 = vpop.f32.mrf.mxu0
  %635 = vdwg.mxu0
  %636 = vmatprep.subr.bf16.mxu0 0
  %637 = vmatpush1.bf16.msra.mxu0 %v491
  %638 = vmatprep.subr.bf16.mxu0 0
  %639 = vmatpush1.bf16.msra.mxu0 %v490
  %640 = vmatprep.subr.bf16.mxu0 0
  %641 = vmatpush1.bf16.msra.mxu0 %v489
  %642 = vmatprep.subr.bf16.mxu0 0
  %643 = vmatpush1.bf16.msra.mxu0 %v488
  %644 = vmatprep.subr.bf16.mxu0 0
  %645 = vmatpush1.bf16.msra.mxu0 %v487
  %646 = vmatprep.subr.bf16.mxu0 0
  %647 = vmatpush1.bf16.msra.mxu0 %v486
  %648 = vmatprep.subr.bf16.mxu0 0
  %649 = vmatpush1.bf16.msra.mxu0 %v485
  %650 = vmatprep.subr.bf16.mxu0 0
  %651 = vmatpush1.bf16.msra.mxu0 %v484
  %652 = vmatprep.subr.bf16.mxu0 0
  %653 = vmatpush2.bf16.msra.mxu0 %v499
  %654 = vmatprep.subr.bf16.mxu0 0
  %655 = vmatpush2.bf16.msra.mxu0 %v498
  %656 = vmatprep.subr.bf16.mxu0 0
  %657 = vmatpush2.bf16.msra.mxu0 %v497
  %658 = vmatprep.subr.bf16.mxu0 0
  %659 = vmatpush2.bf16.msra.mxu0 %v496
  %660 = vmatprep.subr.bf16.mxu0 0
  %661 = vmatpush2.bf16.msra.mxu0 %v495
  %662 = vmatprep.subr.bf16.mxu0 0
  %663 = vmatpush2.bf16.msra.mxu0 %v494
  %664 = vmatprep.subr.bf16.mxu0 0
  %665 = vmatpush2.bf16.msra.mxu0 %v493
  %666 = vmatprep.subr.bf16.mxu0 0
  %667 = vmatpush2.bf16.msra.mxu0 %v492
  %668 = vmatprep.mubr.bf16.mxu0 %v199
  %669 = vmatmul.mubr.bf16.gmra.mxu0 %v198
  %v670 = vpop.f32.mrf.mxu0
  %v671 = vadd.f32 %v631, %v670
  %v672 = vpop.f32.mrf.mxu0
  %v673 = vpop.f32.mrf.mxu0
  %v674 = vpop.f32.mrf.mxu0
  %675 = vdwg.mxu0
  %676 = vmatprep.subr.bf16.mxu0 0
  %677 = vmatpush1.bf16.msra.mxu0 %v507
  %678 = vmatprep.subr.bf16.mxu0 0
  %679 = vmatpush1.bf16.msra.mxu0 %v506
  %680 = vmatprep.subr.bf16.mxu0 0
  %681 = vmatpush1.bf16.msra.mxu0 %v505
  %682 = vmatprep.subr.bf16.mxu0 0
  %683 = vmatpush1.bf16.msra.mxu0 %v504
  %684 = vmatprep.subr.bf16.mxu0 0
  %685 = vmatpush1.bf16.msra.mxu0 %v503
  %686 = vmatprep.subr.bf16.mxu0 0
  %687 = vmatpush1.bf16.msra.mxu0 %v502
  %688 = vmatprep.subr.bf16.mxu0 0
  %689 = vmatpush1.bf16.msra.mxu0 %v501
  %690 = vmatprep.subr.bf16.mxu0 0
  %691 = vmatpush1.bf16.msra.mxu0 %v500
  %692 = vmatprep.subr.bf16.mxu0 0
  %693 = vmatpush2.bf16.msra.mxu0 %v515
  %694 = vmatprep.subr.bf16.mxu0 0
  %695 = vmatpush2.bf16.msra.mxu0 %v514
  %696 = vmatprep.subr.bf16.mxu0 0
  %697 = vmatpush2.bf16.msra.mxu0 %v513
  %698 = vmatprep.subr.bf16.mxu0 0
  %699 = vmatpush2.bf16.msra.mxu0 %v512
  %700 = vmatprep.subr.bf16.mxu0 0
  %701 = vmatpush2.bf16.msra.mxu0 %v511
  %702 = vmatprep.subr.bf16.mxu0 0
  %703 = vmatpush2.bf16.msra.mxu0 %v510
  %704 = vmatprep.subr.bf16.mxu0 0
  %705 = vmatpush2.bf16.msra.mxu0 %v509
  %706 = vmatprep.subr.bf16.mxu0 0
  %707 = vmatpush2.bf16.msra.mxu0 %v508
  %708 = vmatprep.mubr.bf16.mxu0 %v201
  %709 = vmatmul.mubr.bf16.gmra.mxu0 %v200
  %v710 = vpop.f32.mrf.mxu0
  %v711 = vadd.f32 %v671, %v710
  %v712 = vpop.f32.mrf.mxu0
  %v713 = vpop.f32.mrf.mxu0
  %v714 = vpop.f32.mrf.mxu0
  %715 = vdwg.mxu0
  %716 = vmatprep.subr.bf16.mxu0 0
  %717 = vmatpush1.bf16.msra.mxu0 %v523
  %718 = vmatprep.subr.bf16.mxu0 0
  %719 = vmatpush1.bf16.msra.mxu0 %v522
  %720 = vmatprep.subr.bf16.mxu0 0
  %721 = vmatpush1.bf16.msra.mxu0 %v521
  %722 = vmatprep.subr.bf16.mxu0 0
  %723 = vmatpush1.bf16.msra.mxu0 %v520
  %724 = vmatprep.subr.bf16.mxu0 0
  %725 = vmatpush1.bf16.msra.mxu0 %v519
  %726 = vmatprep.subr.bf16.mxu0 0
  %727 = vmatpush1.bf16.msra.mxu0 %v518
  %728 = vmatprep.subr.bf16.mxu0 0
  %729 = vmatpush1.bf16.msra.mxu0 %v517
  %730 = vmatprep.subr.bf16.mxu0 0
  %731 = vmatpush1.bf16.msra.mxu0 %v516
  %732 = vmatprep.subr.bf16.mxu0 0
  %733 = vmatpush2.bf16.msra.mxu0 %v531
  %734 = vmatprep.subr.bf16.mxu0 0
  %735 = vmatpush2.bf16.msra.mxu0 %v530
  %736 = vmatprep.subr.bf16.mxu0 0
  %737 = vmatpush2.bf16.msra.mxu0 %v529
  %738 = vmatprep.subr.bf16.mxu0 0
  %739 = vmatpush2.bf16.msra.mxu0 %v528
  %740 = vmatprep.subr.bf16.mxu0 0
  %741 = vmatpush2.bf16.msra.mxu0 %v527
  %742 = vmatprep.subr.bf16.mxu0 0
  %743 = vmatpush2.bf16.msra.mxu0 %v526
  %744 = vmatprep.subr.bf16.mxu0 0
  %745 = vmatpush2.bf16.msra.mxu0 %v525
  %746 = vmatprep.subr.bf16.mxu0 0
  %747 = vmatpush2.bf16.msra.mxu0 %v524
  %748 = vmatprep.mubr.bf16.mxu0 %v203
  %749 = vmatmul.mubr.bf16.gmra.mxu0 %v202
  %v750 = vpop.f32.mrf.mxu0
  %v751 = vadd.f32 %v711, %v750
  %v752 = vpop.f32.mrf.mxu0
  %v753 = vpop.f32.mrf.mxu0
  %v754 = vpop.f32.mrf.mxu0
  %755 = vdwg.mxu0
  %v756 = vpack.c.bf16 %v751, %v751
  %v757 = vld [vmem:[%s0] sm:$0xf]
  %v758 = vld [vmem:[%s5] sm:$0xf]
  %v759 = vld [vmem:[%s5 + $0x4] sm:$0xf]
  %v760 = vld [vmem:[%s1] sm:$0xf]
  %v761 = vld [vmem:[%s6] sm:$0xf]
  %vm762 = vcmask 64512
  %v764 = vsel %vm762, %v760, 0
  %vm766 = vcmask 1043456
  %v768 = vsel %vm766, %v761, 0
  %770 = vmatprep.subr.bf16.mxu0 0
  %771 = vmatpush1.bf16.msra.mxu0 0
  %772 = vmatprep.subr.bf16.mxu0 0
  %773 = vmatpush1.bf16.msra.mxu0 0
  %774 = vmatprep.subr.bf16.mxu0 0
  %775 = vmatpush1.bf16.msra.mxu0 0
  %776 = vmatprep.subr.bf16.mxu0 0
  %777 = vmatpush1.bf16.msra.mxu0 0
  %778 = vmatprep.subr.bf16.mxu0 0
  %779 = vmatpush1.bf16.msra.mxu0 0
  %780 = vmatprep.subr.bf16.mxu0 0
  %781 = vmatpush1.bf16.msra.mxu0 0
  %782 = vmatprep.subr.bf16.mxu0 0
  %783 = vmatpush1.bf16.msra.mxu0 0
  %784 = vmatprep.subr.bf16.mxu0 0
  %785 = vmatpush1.bf16.msra.mxu0 %v768
  %786 = vmatprep.subr.bf16.mxu0 0
  %787 = vmatpush2.bf16.msra.mxu0 0
  %788 = vmatprep.subr.bf16.mxu0 0
  %789 = vmatpush2.bf16.msra.mxu0 0
  %790 = vmatprep.subr.bf16.mxu0 0
  %791 = vmatpush2.bf16.msra.mxu0 0
  %792 = vmatprep.subr.bf16.mxu0 0
  %793 = vmatpush2.bf16.msra.mxu0 0
  %794 = vmatprep.subr.bf16.mxu0 0
  %795 = vmatpush2.bf16.msra.mxu0 0
  %796 = vmatprep.subr.bf16.mxu0 0
  %797 = vmatpush2.bf16.msra.mxu0 0
  %798 = vmatprep.subr.bf16.mxu0 0
  %799 = vmatpush2.bf16.msra.mxu0 0
  %800 = vmatprep.subr.bf16.mxu0 0
  %801 = vmatpush2.bf16.msra.mxu0 0
  %802 = vmatprep.mubr.bf16.mxu0 0
  %803 = vmatmul.mubr.bf16.gmra.mxu0 %v764
  %v804 = vpop.f32.mrf.mxu0
  %v805 = vadd.f32 0.0, %v804
  %v806 = vpop.f32.mrf.mxu0
  %v807 = vpop.f32.mrf.mxu0
  %v808 = vpop.f32.mrf.mxu0
  %809 = vdwg.mxu0
  %v812 = vunpack.c.l.b16 %v758
  %v813 = vunpack.c.l.b16 %v759
  %v814 = vpack.c.b16 %v813, %v812
  %vm816 = vcmask 130048
  %v818 = vsel %vm816, %v757, 0
  %820 = vmatprep.subr.bf16.mxu0 0
  %821 = vmatpush1.bf16.msra.mxu0 0
  %822 = vmatprep.subr.bf16.mxu0 0
  %823 = vmatpush1.bf16.msra.mxu0 0
  %824 = vmatprep.subr.bf16.mxu0 0
  %825 = vmatpush1.bf16.msra.mxu0 0
  %826 = vmatprep.subr.bf16.mxu0 0
  %827 = vmatpush1.bf16.msra.mxu0 0
  %828 = vmatprep.subr.bf16.mxu0 0
  %829 = vmatpush1.bf16.msra.mxu0 0
  %830 = vmatprep.subr.bf16.mxu0 0
  %831 = vmatpush1.bf16.msra.mxu0 0
  %832 = vmatprep.subr.bf16.mxu0 0
  %833 = vmatpush1.bf16.msra.mxu0 0
  %834 = vmatprep.subr.bf16.mxu0 0
  %835 = vmatpush1.bf16.msra.mxu0 %v814
  %836 = vmatprep.subr.bf16.mxu0 0
  %837 = vmatpush2.bf16.msra.mxu0 0
  %838 = vmatprep.subr.bf16.mxu0 0
  %839 = vmatpush2.bf16.msra.mxu0 0
  %840 = vmatprep.subr.bf16.mxu0 0
  %841 = vmatpush2.bf16.msra.mxu0 0
  %842 = vmatprep.subr.bf16.mxu0 0
  %843 = vmatpush2.bf16.msra.mxu0 0
  %844 = vmatprep.subr.bf16.mxu0 0
  %845 = vmatpush2.bf16.msra.mxu0 0
  %846 = vmatprep.subr.bf16.mxu0 0
  %847 = vmatpush2.bf16.msra.mxu0 0
  %848 = vmatprep.subr.bf16.mxu0 0
  %849 = vmatpush2.bf16.msra.mxu0 0
  %850 = vmatprep.subr.bf16.mxu0 0
  %851 = vmatpush2.bf16.msra.mxu0 0
  %852 = vmatprep.mubr.bf16.mxu0 0
  %853 = vmatmul.mubr.bf16.gmra.mxu0 %v818
  %v854 = vpop.f32.mrf.mxu0
  %v855 = vadd.f32 %v805, %v854
  %v856 = vpop.f32.mrf.mxu0
  %v857 = vpop.f32.mrf.mxu0
  %v858 = vpop.f32.mrf.mxu0
  %859 = vdwg.mxu0
  %v860 = vld [vmem:[%s7] sm:$0x1]
  %v862 = vlaneseq
  %v863 = vshrl.u32 %v862, 7
  %v864 = vsub.s32 0, %v863
  %v865 = vrot.slane %v860, %v864
  %v867 = vadd.f32 %v855, %v865
  %v868 = vmax.f32 %v867, 0.0
  %v869 = vpack.c.bf16 %v868, %v868
  %v870 = vld [vmem:[%s8] sm:$0xf]
  %v871 = vld [vmem:[%s8 + $0x4] sm:$0xf]
  %v872 = vld [vmem:[%s8 + $0x8] sm:$0xf]
  %v873 = vld [vmem:[%s8 + $0xc] sm:$0xf]
  %v874 = vld [vmem:[%s8 + $0x10] sm:$0xf]
  %v875 = vld [vmem:[%s8 + $0x14] sm:$0xf]
  %v876 = vld [vmem:[%s8 + $0x18] sm:$0xf]
  %v877 = vld [vmem:[%s8 + $0x1c] sm:$0xf]
  %v878 = vld [vmem:[%s9] sm:$0xf]
  %v879 = vld [vmem:[%s9 + $0x4] sm:$0xf]
  %v880 = vld [vmem:[%s9 + $0x8] sm:$0xf]
  %v881 = vld [vmem:[%s9 + $0xc] sm:$0xf]
  %v886 = vunpack.c.l.b16 %v878
  %v887 = vunpack.c.l.b16 %v879
  %v888 = vunpack.c.l.b16 %v880
  %v889 = vunpack.c.l.b16 %v881
  %v890 = vpack.c.b16 %v887, %v886
  %v891 = vpack.c.b16 %v889, %v888
  %vm894 = vcmask 261120
  %v896 = vsel %vm894, %v756, 0
  %898 = vmatprep.subr.bf16.mxu0 0
  %899 = vmatpush1.bf16.msra.mxu0 0
  %900 = vmatprep.subr.bf16.mxu0 0
  %901 = vmatpush1.bf16.msra.mxu0 0
  %902 = vmatprep.subr.bf16.mxu0 0
  %903 = vmatpush1.bf16.msra.mxu0 0
  %904 = vmatprep.subr.bf16.mxu0 0
  %905 = vmatpush1.bf16.msra.mxu0 0
  %906 = vmatprep.subr.bf16.mxu0 0
  %907 = vmatpush1.bf16.msra.mxu0 0
  %908 = vmatprep.subr.bf16.mxu0 0
  %909 = vmatpush1.bf16.msra.mxu0 0
  %910 = vmatprep.subr.bf16.mxu0 0
  %911 = vmatpush1.bf16.msra.mxu0 %v891
  %912 = vmatprep.subr.bf16.mxu0 0
  %913 = vmatpush1.bf16.msra.mxu0 %v890
  %914 = vmatprep.subr.bf16.mxu0 0
  %915 = vmatpush2.bf16.msra.mxu0 0
  %916 = vmatprep.subr.bf16.mxu0 0
  %917 = vmatpush2.bf16.msra.mxu0 0
  %918 = vmatprep.subr.bf16.mxu0 0
  %919 = vmatpush2.bf16.msra.mxu0 0
  %920 = vmatprep.subr.bf16.mxu0 0
  %921 = vmatpush2.bf16.msra.mxu0 0
  %922 = vmatprep.subr.bf16.mxu0 0
  %923 = vmatpush2.bf16.msra.mxu0 0
  %924 = vmatprep.subr.bf16.mxu0 0
  %925 = vmatpush2.bf16.msra.mxu0 0
  %926 = vmatprep.subr.bf16.mxu0 0
  %927 = vmatpush2.bf16.msra.mxu0 0
  %928 = vmatprep.subr.bf16.mxu0 0
  %929 = vmatpush2.bf16.msra.mxu0 0
  %930 = vmatprep.mubr.bf16.mxu0 0
  %931 = vmatmul.mubr.bf16.gmra.mxu0 %v896
  %v932 = vpop.f32.mrf.mxu0
  %v933 = vadd.f32 0.0, %v932
  %v934 = vpop.f32.mrf.mxu0
  %v935 = vpop.f32.mrf.mxu0
  %v936 = vpop.f32.mrf.mxu0
  %937 = vdwg.mxu0
  %v946 = vunpack.c.l.b16 %v870
  %v947 = vunpack.c.l.b16 %v871
  %v948 = vunpack.c.l.b16 %v872
  %v949 = vunpack.c.l.b16 %v873
  %v950 = vunpack.c.l.b16 %v874
  %v951 = vunpack.c.l.b16 %v875
  %v952 = vunpack.c.l.b16 %v876
  %v953 = vunpack.c.l.b16 %v877
  %v954 = vpack.c.b16 %v947, %v946
  %v955 = vpack.c.b16 %v949, %v948
  %v956 = vpack.c.b16 %v951, %v950
  %v957 = vpack.c.b16 %v953, %v952
  %vm962 = vcmask 523264
  %v964 = vsel %vm962, %v869, 0
  %966 = vmatprep.subr.bf16.mxu0 0
  %967 = vmatpush1.bf16.msra.mxu0 0
  %968 = vmatprep.subr.bf16.mxu0 0
  %969 = vmatpush1.bf16.msra.mxu0 0
  %970 = vmatprep.subr.bf16.mxu0 0
  %971 = vmatpush1.bf16.msra.mxu0 0
  %972 = vmatprep.subr.bf16.mxu0 0
  %973 = vmatpush1.bf16.msra.mxu0 0
  %974 = vmatprep.subr.bf16.mxu0 0
  %975 = vmatpush1.bf16.msra.mxu0 %v957
  %976 = vmatprep.subr.bf16.mxu0 0
  %977 = vmatpush1.bf16.msra.mxu0 %v956
  %978 = vmatprep.subr.bf16.mxu0 0
  %979 = vmatpush1.bf16.msra.mxu0 %v955
  %980 = vmatprep.subr.bf16.mxu0 0
  %981 = vmatpush1.bf16.msra.mxu0 %v954
  %982 = vmatprep.subr.bf16.mxu0 0
  %983 = vmatpush2.bf16.msra.mxu0 0
  %984 = vmatprep.subr.bf16.mxu0 0
  %985 = vmatpush2.bf16.msra.mxu0 0
  %986 = vmatprep.subr.bf16.mxu0 0
  %987 = vmatpush2.bf16.msra.mxu0 0
  %988 = vmatprep.subr.bf16.mxu0 0
  %989 = vmatpush2.bf16.msra.mxu0 0
  %990 = vmatprep.subr.bf16.mxu0 0
  %991 = vmatpush2.bf16.msra.mxu0 0
  %992 = vmatprep.subr.bf16.mxu0 0
  %993 = vmatpush2.bf16.msra.mxu0 0
  %994 = vmatprep.subr.bf16.mxu0 0
  %995 = vmatpush2.bf16.msra.mxu0 0
  %996 = vmatprep.subr.bf16.mxu0 0
  %997 = vmatpush2.bf16.msra.mxu0 0
  %998 = vmatprep.mubr.bf16.mxu0 0
  %999 = vmatmul.mubr.bf16.gmra.mxu0 %v964
  %v1000 = vpop.f32.mrf.mxu0
  %v1001 = vadd.f32 %v933, %v1000
  %v1002 = vpop.f32.mrf.mxu0
  %v1003 = vpop.f32.mrf.mxu0
  %v1004 = vpop.f32.mrf.mxu0
  %1005 = vdwg.mxu0
  %v1006 = vld [vmem:[%s10] sm:$0x1]
  %v1008 = vlaneseq
  %v1009 = vshrl.u32 %v1008, 7
  %v1010 = vsub.s32 0, %v1009
  %v1011 = vrot.slane %v1006, %v1010
  %v1013 = vadd.f32 %v1001, %v1011
  %v1014 = vmax.f32 %v1013, 0.0
  %v1015 = vpack.c.bf16 %v1014, %v1014
  %v1016 = vld [vmem:[%s11] sm:$0xf]
  %v1017 = vld [vmem:[%s11 + $0x4] sm:$0xf]
  %v1018 = vld [vmem:[%s11 + $0x8] sm:$0xf]
  %v1019 = vld [vmem:[%s11 + $0xc] sm:$0xf]
  %v1020 = vld [vmem:[%s11 + $0x10] sm:$0xf]
  %v1021 = vld [vmem:[%s11 + $0x14] sm:$0xf]
  %v1022 = vld [vmem:[%s11 + $0x18] sm:$0xf]
  %v1023 = vld [vmem:[%s11 + $0x1c] sm:$0xf]
  %v1024 = vld [vmem:[%s12] sm:$0x1]
  %v1026 = vlaneseq
  %v1027 = vshrl.u32 %v1026, 7
  %v1028 = vsub.s32 0, %v1027
  %v1029 = vrot.slane %v1024, %v1028
  %v1039 = vunpack.c.l.b16 %v1016
  %v1040 = vunpack.c.l.b16 %v1017
  %v1041 = vunpack.c.l.b16 %v1018
  %v1042 = vunpack.c.l.b16 %v1019
  %v1043 = vunpack.c.l.b16 %v1020
  %v1044 = vunpack.c.l.b16 %v1021
  %v1045 = vunpack.c.l.b16 %v1022
  %v1046 = vunpack.c.l.b16 %v1023
  %v1047 = vpack.c.b16 %v1040, %v1039
  %v1048 = vpack.c.b16 %v1042, %v1041
  %v1049 = vpack.c.b16 %v1044, %v1043
  %v1050 = vpack.c.b16 %v1046, %v1045
  %v1056 = vsel %vm962, %v1015, 0
  %1058 = vmatprep.subr.bf16.mxu0 0
  %1059 = vmatpush1.bf16.msra.mxu0 0
  %1060 = vmatprep.subr.bf16.mxu0 0
  %1061 = vmatpush1.bf16.msra.mxu0 0
  %1062 = vmatprep.subr.bf16.mxu0 0
  %1063 = vmatpush1.bf16.msra.mxu0 0
  %1064 = vmatprep.subr.bf16.mxu0 0
  %1065 = vmatpush1.bf16.msra.mxu0 0
  %1066 = vmatprep.subr.bf16.mxu0 0
  %1067 = vmatpush1.bf16.msra.mxu0 %v1050
  %1068 = vmatprep.subr.bf16.mxu0 0
  %1069 = vmatpush1.bf16.msra.mxu0 %v1049
  %1070 = vmatprep.subr.bf16.mxu0 0
  %1071 = vmatpush1.bf16.msra.mxu0 %v1048
  %1072 = vmatprep.subr.bf16.mxu0 0
  %1073 = vmatpush1.bf16.msra.mxu0 %v1047
  %1074 = vmatprep.subr.bf16.mxu0 0
  %1075 = vmatpush2.bf16.msra.mxu0 0
  %1076 = vmatprep.subr.bf16.mxu0 0
  %1077 = vmatpush2.bf16.msra.mxu0 0
  %1078 = vmatprep.subr.bf16.mxu0 0
  %1079 = vmatpush2.bf16.msra.mxu0 0
  %1080 = vmatprep.subr.bf16.mxu0 0
  %1081 = vmatpush2.bf16.msra.mxu0 0
  %1082 = vmatprep.subr.bf16.mxu0 0
  %1083 = vmatpush2.bf16.msra.mxu0 0
  %1084 = vmatprep.subr.bf16.mxu0 0
  %1085 = vmatpush2.bf16.msra.mxu0 0
  %1086 = vmatprep.subr.bf16.mxu0 0
  %1087 = vmatpush2.bf16.msra.mxu0 0
  %1088 = vmatprep.subr.bf16.mxu0 0
  %1089 = vmatpush2.bf16.msra.mxu0 0
  %1090 = vmatprep.mubr.bf16.mxu0 0
  %1091 = vmatmul.mubr.bf16.gmra.mxu0 %v1056
  %v1092 = vpop.f32.mrf.mxu0
  %v1093 = vadd.f32 %v1029, %v1092
  %v1094 = vpop.f32.mrf.mxu0
  %v1095 = vpop.f32.mrf.mxu0
  %v1096 = vpop.f32.mrf.mxu0
  %1097 = vdwg.mxu0
  %vm1098 = vcmask 15360
  %1099 = vst.msk [vmem:[%s13] sm:$0xff] %vm1098, %v1093
  // Predicated region
  $region54: #{critic_forward.1} parent=0 // pred_check
    _
  $region55: #{critic_forward.1} parent=0 // pred_check_branch
    %1101 = sbr.rel (0) target = $region57
  $region56: #{critic_forward.1} parent=0 // pred_region
    _
  $region57: #{critic_forward.1} parent=0 // pred_fallthru
    _
  // Predicated region
  $region58: #{critic_forward.1} parent=0 // pred_check
    _
  $region59: #{critic_forward.1} parent=0 // pred_check_branch
    %1103 = sbr.rel (0) target = $region61
  $region60: #{critic_forward.1} parent=0 // pred_region
    _
  $region61: #{critic_forward.1} parent=0 // pred_fallthru
    _

</llo_original>
